<compile_context>
chip_gen: v7x
topology: tpu7x:2x2x1
jax: 0.10.0
libtpu: 0.0.40
codegen_flags: <defaults>
</compile_context>

<pallas_src>
import math
from functools import partial

import jax
import jax.numpy as jnp
from jax import lax
from jax.experimental import pallas as pl
from jax.experimental.pallas import tpu as pltpu

# ---- module configuration (mirrors __init__ args) ---------------------------
INPUT_DIM = 32                 # input_dim (hidden size of sequence_tensor)
NUM_WIDTH_EMBEDDINGS = 10      # num_width_embeddings
SPAN_WIDTH_EMB_DIM = 16        # span_width_embedding_dim
NUM_IDENTITY_BUCKETS = 4       # bucket_values default
BUCKET_WIDTHS = True           # bucket_widths


def _span_kernel(seq_ref, starts_ref, ends_ref, mask_ref, wemb_ref, out_ref,
                 *, wd):
    """One grid step = one batch element.

    seq_ref    : (1, T, D)        f32
    starts_ref : (1, 1, S)        i32   inclusive span starts
    ends_ref   : (1, 1, S)        i32   inclusive span ends
    mask_ref   : (1, 1, S)        f32   span_indices_mask
    wemb_ref   : (NW, CW)         f32   width table, lane-padded to CW >= wd
    out_ref    : (1, S, OUT_PAD)  f32   lane-dense (multiple-of-128) output
    """
    _, T, D = seq_ref.shape
    S = starts_ref.shape[2]
    NW, CW = wemb_ref.shape
    OUT_PAD = out_ref.shape[2]

    # ---- build the combined gather matrix [seq ; width_table] ---------------
    seq = seq_ref[0]                                          # (T, D)
    if D < CW:                                                # only if wd > D
        seq = jnp.concatenate(
            [seq, jnp.zeros((T, CW - D), jnp.float32)], axis=1)
    comb = jnp.concatenate([seq, wemb_ref[...]], axis=0)      # (T+NW, CW)

    starts = starts_ref[0]                                    # (1, S) i32
    ends = ends_ref[0]                                        # (1, S) i32
    mask = mask_ref[0]                                        # (1, S) f32

    # ---- span widths -> bucket_values ---------------------------------------
    widths = ends - starts                                    # (1, S) i32
    if BUCKET_WIDTHS:
        w_f = jnp.maximum(widths.astype(jnp.float32), 1.0)    # guard log(0)
        log_idx = jnp.floor(jnp.log(w_f) / math.log(2.0)).astype(jnp.int32) \
            + (NUM_IDENTITY_BUCKETS - 1)
        width_idx = jnp.where(widths <= NUM_IDENTITY_BUCKETS, widths, log_idx)
        width_idx = jnp.clip(width_idx, 0, NW - 1)            # (1, S)
    else:
        width_idx = widths

    # ---- one fused, mask-folded one-hot matmul on the MXU --------------------
    # one-hot column layout: [starts (S) | ends (S) | T + width_idx (S)]
    idx_all = jnp.concatenate([starts, ends, T + width_idx], axis=1)  # (1, 3S)
    mask3 = jnp.concatenate([mask, mask, mask], axis=1)               # (1, 3S)
    iota_r = lax.broadcasted_iota(jnp.int32, (T + NW, 3 * S), 0)
    one_hot = jnp.where(iota_r == idx_all, mask3, 0.0)                # (T+NW, 3S)

    res = lax.dot_general(one_hot, comb, (((0,), (0,)), ((), ())),
                          preferred_element_type=jnp.float32)         # (3S, CW)

    # ---- direct lane-slice stores into the lane-dense output ----------------
    out_ref[0, :, 0:D] = res[0:S, 0:D]              # start-token embeddings
    out_ref[0, :, D:2 * D] = res[S:2 * S, 0:D]      # end-token embeddings
    if 2 * D + CW <= OUT_PAD:
        # width rows have zeros in columns [wd:CW), so the wide store also
        # zero-fills part of the padding for free.
        out_ref[0, :, 2 * D:2 * D + CW] = res[2 * S:3 * S]
        pad_start = 2 * D + CW
    else:
        out_ref[0, :, 2 * D:2 * D + wd] = res[2 * S:3 * S, 0:wd]
        pad_start = 2 * D + wd
    if pad_start < OUT_PAD:
        out_ref[0, :, pad_start:] = jnp.zeros((S, OUT_PAD - pad_start),
                                              jnp.float32)


def span_extractor_forward(sequence_tensor, span_indices, width_embedding,
                           span_indices_mask=None):
    """Wrapper calling the Pallas kernel.

    sequence_tensor : (B, T, D) float32
    span_indices    : (B, S, 2) int32 (inclusive start/end)
    width_embedding : (NW, WD) float32
    span_indices_mask : (B, S) bool or None
    returns         : (B, S, 2D + WD) float32
    """
    B, T, D = sequence_tensor.shape
    S = span_indices.shape[1]
    NW, WD = width_embedding.shape
    out_dim = 2 * D + WD
    out_pad = ((out_dim + 127) // 128) * 128      # lane-dense output width
    cw = max(D, WD)

    # Clamp indices: the fused one-hot gather would otherwise silently select
    # width-table rows / zeros for out-of-range endpoints.
    starts = jnp.clip(span_indices[..., 0].astype(jnp.int32), 0, T - 1)
    ends = jnp.clip(span_indices[..., 1].astype(jnp.int32), 0, T - 1)
    starts = starts.reshape(B, 1, S)
    ends = ends.reshape(B, 1, S)
    if span_indices_mask is None:
        mask = jnp.ones((B, 1, S), jnp.float32)
    else:
        mask = span_indices_mask.astype(jnp.float32).reshape(B, 1, S)

    # Lane-pad the constant width-embedding table once (outside the kernel).
    wemb_p = width_embedding
    if WD < cw:
        wemb_p = jnp.pad(width_embedding, ((0, 0), (0, cw - WD)))

    grid_spec = pltpu.PrefetchScalarGridSpec(
        num_scalar_prefetch=0,
        grid=(B,),
        in_specs=[
            pl.BlockSpec((1, T, D), lambda b: (b, 0, 0)),     # sequence
            pl.BlockSpec((1, 1, S), lambda b: (b, 0, 0)),     # starts
            pl.BlockSpec((1, 1, S), lambda b: (b, 0, 0)),     # ends
            pl.BlockSpec((1, 1, S), lambda b: (b, 0, 0)),     # span mask
            pl.BlockSpec((NW, cw), lambda b: (0, 0)),         # width table
        ],
        out_specs=pl.BlockSpec((1, S, out_pad), lambda b: (b, 0, 0)),
    )

    out_padded = pl.pallas_call(
        partial(_span_kernel, wd=WD),
        out_shape=jax.ShapeDtypeStruct((B, S, out_pad), jnp.float32),
        grid_spec=grid_spec,
        compiler_params=pltpu.CompilerParams(
            dimension_semantics=("parallel",)),
    )(sequence_tensor, starts, ends, mask, wemb_p)

    return out_padded[..., :out_dim]


# ---- pure-JAX reference (for sanity check) -----------------------------------
def _bucket_values_ref(d, num_identity_buckets=4, num_total_buckets=10):
    log_idx = jnp.floor(
        jnp.log(jnp.maximum(d.astype(jnp.float32), 1.0)) / math.log(2.0)
    ).astype(jnp.int32) + (num_identity_buckets - 1)
    use_id = (d <= num_identity_buckets).astype(jnp.int32)
    combined = use_id * d + (1 - use_id) * log_idx
    return jnp.clip(combined, 0, num_total_buckets - 1)


def _ref_forward(seq, span_indices, wemb, span_mask):
    starts = span_indices[..., 0]
    ends = span_indices[..., 1]
    gather = jax.vmap(lambda s, idx: s[idx])
    start_emb = gather(seq, starts)
    end_emb = gather(seq, ends)
    widths = ends - starts
    if BUCKET_WIDTHS:
        widths = _bucket_values_ref(widths,
                                    num_total_buckets=NUM_WIDTH_EMBEDDINGS)
    width_emb = wemb[widths]
    out = jnp.concatenate([start_emb, end_emb, width_emb], axis=-1)
    return out * span_mask.astype(jnp.float32)[..., None]


if __name__ == "__main__":
    B, T, D, S = 2, 16, INPUT_DIM, 8

    key = jax.random.PRNGKey(0)
    k_seq, k_start, k_len, k_emb, k_mask = jax.random.split(key, 5)

    sequence_tensor = jax.random.normal(k_seq, (B, T, D), jnp.float32)

    span_starts = jax.random.randint(k_start, (B, S), 0, T, jnp.int32)
    span_lens = jax.random.randint(k_len, (B, S), 0, T, jnp.int32)
    span_ends = jnp.minimum(span_starts + span_lens, T - 1)
    span_indices = jnp.stack([span_starts, span_ends], axis=-1)     # (B, S, 2)

    # nn.Embedding(num_width_embeddings, span_width_embedding_dim): N(0, 1) init
    width_embedding = jax.random.normal(
        k_emb, (NUM_WIDTH_EMBEDDINGS, SPAN_WIDTH_EMB_DIM), jnp.float32)

    span_indices_mask = jax.random.bernoulli(k_mask, 0.8, (B, S))

    out = span_extractor_forward(sequence_tensor, span_indices,
                                 width_embedding, span_indices_mask)
    out = jax.block_until_ready(out)

    ref = _ref_forward(sequence_tensor, span_indices, width_embedding,
                       span_indices_mask)
    assert out.shape == (B, S, 2 * D + SPAN_WIDTH_EMB_DIM)
    assert jnp.allclose(out, ref, atol=1e-5, rtol=1e-5)

    print("KERNEL_OK")
</pallas_src>

<mosaic_0001>
module attributes {stable_mosaic.version = 11 : i64} {
  func.func @_span_kernel(%arg0: i32, %arg1: memref<1x16x32xf32, #tpu.memory_space<vmem>>, %arg2: memref<1x1x8xi32, #tpu.memory_space<vmem>>, %arg3: memref<1x1x8xi32, #tpu.memory_space<vmem>>, %arg4: memref<1x1x8xf32, #tpu.memory_space<vmem>>, %arg5: memref<10x32xf32, #tpu.memory_space<vmem>>, %arg6: memref<1x8x128xf32, #tpu.memory_space<vmem>>) attributes {dimension_semantics = [#tpu.dimension_semantics<parallel>], iteration_bounds = array<i64: 2>, scalar_prefetch = 0 : i64, scratch_operands = 0 : i64, tpu.core_type = #tpu.core_type<tc>, window_params = [{transform_indices = @transform_0, window_bounds = array<i64: 1, 16, 32>}, {transform_indices = @transform_1, window_bounds = array<i64: 1, 1, 8>}, {transform_indices = @transform_2, window_bounds = array<i64: 1, 1, 8>}, {transform_indices = @transform_3, window_bounds = array<i64: 1, 1, 8>}, {pipeline_mode = #tpu.pipeline_mode<synchronous>, transform_indices = @transform_4, window_bounds = array<i64: 10, 32>}, {transform_indices = @transform_5, window_bounds = array<i64: 1, 8, 128>}]} {
    %c0 = arith.constant 0 : index
    %c0_0 = arith.constant 0 : index
    %c0_1 = arith.constant 0 : index
    %0 = vector.load %arg1[%c0, %c0_0, %c0_1] : memref<1x16x32xf32, #tpu.memory_space<vmem>>, vector<1x16x32xf32>
    %1 = vector.shape_cast %0 : vector<1x16x32xf32> to vector<16x32xf32>
    %c0_2 = arith.constant 0 : index
    %c0_3 = arith.constant 0 : index
    %2 = vector.load %arg5[%c0_2, %c0_3] : memref<10x32xf32, #tpu.memory_space<vmem>>, vector<10x32xf32>
    %3 = tpu.concatenate %1, %2 in 0 : vector<16x32xf32>, vector<10x32xf32> -> vector<26x32xf32>
    %c0_4 = arith.constant 0 : index
    %c0_5 = arith.constant 0 : index
    %c0_6 = arith.constant 0 : index
    %4 = vector.load %arg2[%c0_4, %c0_5, %c0_6] : memref<1x1x8xi32, #tpu.memory_space<vmem>>, vector<1x1x8xi32>
    %5 = vector.shape_cast %4 : vector<1x1x8xi32> to vector<1x8xi32>
    %c0_7 = arith.constant 0 : index
    %c0_8 = arith.constant 0 : index
    %c0_9 = arith.constant 0 : index
    %6 = vector.load %arg3[%c0_7, %c0_8, %c0_9] : memref<1x1x8xi32, #tpu.memory_space<vmem>>, vector<1x1x8xi32>
    %7 = vector.shape_cast %6 : vector<1x1x8xi32> to vector<1x8xi32>
    %c0_10 = arith.constant 0 : index
    %c0_11 = arith.constant 0 : index
    %c0_12 = arith.constant 0 : index
    %8 = vector.load %arg4[%c0_10, %c0_11, %c0_12] : memref<1x1x8xf32, #tpu.memory_space<vmem>>, vector<1x1x8xf32>
    %9 = vector.shape_cast %8 : vector<1x1x8xf32> to vector<1x8xf32>
    %10 = arith.subi %7, %5 : vector<1x8xi32>
    %11 = arith.sitofp %10 : vector<1x8xi32> to vector<1x8xf32>
    %cst = arith.constant 1.000000e+00 : f32
    %12 = vector.broadcast %cst : f32 to vector<1x8xf32>
    %13 = arith.maximumf %11, %12 : vector<1x8xf32>
    %14 = math.log %13 : vector<1x8xf32>
    %cst_13 = arith.constant 0.693147182 : f32
    %15 = vector.broadcast %cst_13 : f32 to vector<1x8xf32>
    %16 = arith.divf %14, %15 : vector<1x8xf32>
    %17 = math.floor %16 : vector<1x8xf32>
    %18 = arith.fptosi %17 : vector<1x8xf32> to vector<1x8xi32>
    %c3_i32 = arith.constant 3 : i32
    %19 = vector.broadcast %c3_i32 : i32 to vector<1x8xi32>
    %20 = arith.addi %18, %19 : vector<1x8xi32>
    %c4_i32 = arith.constant 4 : i32
    %21 = vector.broadcast %c4_i32 : i32 to vector<1x8xi32>
    %22 = arith.cmpi sle, %10, %21 : vector<1x8xi32>
    %23 = arith.select %22, %10, %20 : vector<1x8xi1>, vector<1x8xi32>
    %c0_i32 = arith.constant 0 : i32
    %c9_i32 = arith.constant 9 : i32
    %24 = vector.broadcast %c0_i32 : i32 to vector<1x8xi32>
    %25 = arith.maxsi %24, %23 : vector<1x8xi32>
    %26 = vector.broadcast %c9_i32 : i32 to vector<1x8xi32>
    %27 = arith.minsi %26, %25 : vector<1x8xi32>
    %c16_i32 = arith.constant 16 : i32
    %28 = vector.broadcast %c16_i32 : i32 to vector<1x8xi32>
    %29 = arith.addi %28, %27 : vector<1x8xi32>
    %30 = tpu.concatenate %5, %7, %29 in 1 : vector<1x8xi32>, vector<1x8xi32>, vector<1x8xi32> -> vector<1x24xi32>
    %31 = tpu.concatenate %9, %9, %9 in 1 : vector<1x8xf32>, vector<1x8xf32>, vector<1x8xf32> -> vector<1x24xf32>
    %32 = tpu.iota {dimensions = array<i32: 0>} : vector<26x24xi32>
    %33 = vector.broadcast %30 : vector<1x24xi32> to vector<26x24xi32>
    %34 = arith.cmpi eq, %32, %33 : vector<26x24xi32>
    %cst_14 = arith.constant 0.000000e+00 : f32
    %35 = vector.shape_cast %31 : vector<1x24xf32> to vector<1x24xf32>
    %36 = vector.broadcast %35 : vector<1x24xf32> to vector<26x24xf32>
    %37 = vector.broadcast %cst_14 : f32 to vector<26x24xf32>
    %38 = arith.select %34, %36, %37 : vector<26x24xi1>, vector<26x24xf32>
    %cst_15 = arith.constant dense<0.000000e+00> : vector<24x32xf32>
    %39 = tpu.matmul %38, %3, %cst_15 {dimension_numbers = #tpu.dot_dimension_numbers<[0], [0], [1], [1], [0, 1, 1, 1], [], []>} : vector<26x24xf32>, vector<26x32xf32>, vector<24x32xf32> -> vector<24x32xf32>
    %40 = vector.extract_strided_slice %39 {offsets = [0, 0], sizes = [8, 32], strides = [1, 1]} : vector<24x32xf32> to vector<8x32xf32>
    %c0_16 = arith.constant 0 : index
    %c0_17 = arith.constant 0 : index
    %c0_18 = arith.constant 0 : index
    %41 = vector.load %arg6[%c0_16, %c0_17, %c0_18] : memref<1x8x128xf32, #tpu.memory_space<vmem>>, vector<1x8x32xf32>
    %42 = vector.shape_cast %41 : vector<1x8x32xf32> to vector<8x32xf32>
    %43 = vector.shape_cast %40 : vector<8x32xf32> to vector<1x8x32xf32>
    tpu.vector_store %arg6[%c0_16, %c0_17, %c0_18], %43 {strides = array<i32>} : memref<1x8x128xf32, #tpu.memory_space<vmem>>, vector<1x8x32xf32>,
    %44 = vector.extract_strided_slice %39 {offsets = [8, 0], sizes = [8, 32], strides = [1, 1]} : vector<24x32xf32> to vector<8x32xf32>
    %c0_19 = arith.constant 0 : index
    %c0_20 = arith.constant 0 : index
    %c32 = arith.constant 32 : index
    %45 = vector.load %arg6[%c0_19, %c0_20, %c32] : memref<1x8x128xf32, #tpu.memory_space<vmem>>, vector<1x8x32xf32>
    %46 = vector.shape_cast %45 : vector<1x8x32xf32> to vector<8x32xf32>
    %47 = vector.shape_cast %44 : vector<8x32xf32> to vector<1x8x32xf32>
    tpu.vector_store %arg6[%c0_19, %c0_20, %c32], %47 {strides = array<i32>} : memref<1x8x128xf32, #tpu.memory_space<vmem>>, vector<1x8x32xf32>,
    %48 = vector.extract_strided_slice %39 {offsets = [16, 0], sizes = [8, 32], strides = [1, 1]} : vector<24x32xf32> to vector<8x32xf32>
    %c0_21 = arith.constant 0 : index
    %c0_22 = arith.constant 0 : index
    %c64 = arith.constant 64 : index
    %49 = vector.load %arg6[%c0_21, %c0_22, %c64] : memref<1x8x128xf32, #tpu.memory_space<vmem>>, vector<1x8x32xf32>
    %50 = vector.shape_cast %49 : vector<1x8x32xf32> to vector<8x32xf32>
    %51 = vector.shape_cast %48 : vector<8x32xf32> to vector<1x8x32xf32>
    tpu.vector_store %arg6[%c0_21, %c0_22, %c64], %51 {strides = array<i32>} : memref<1x8x128xf32, #tpu.memory_space<vmem>>, vector<1x8x32xf32>,
    %cst_23 = arith.constant 0.000000e+00 : f32
    %52 = vector.broadcast %cst_23 : f32 to vector<8x32xf32>
    %c0_24 = arith.constant 0 : index
    %c0_25 = arith.constant 0 : index
    %c96 = arith.constant 96 : index
    %53 = vector.load %arg6[%c0_24, %c0_25, %c96] : memref<1x8x128xf32, #tpu.memory_space<vmem>>, vector<1x8x32xf32>
    %54 = vector.shape_cast %53 : vector<1x8x32xf32> to vector<8x32xf32>
    %55 = vector.shape_cast %52 : vector<8x32xf32> to vector<1x8x32xf32>
    tpu.vector_store %arg6[%c0_24, %c0_25, %c96], %55 {strides = array<i32>} : memref<1x8x128xf32, #tpu.memory_space<vmem>>, vector<1x8x32xf32>,
    return
  }
  func.func @transform_0(%arg0: i32) -> (i32, i32, i32) {
    %c0_i32 = arith.constant 0 : i32
    %c0_i32_0 = arith.constant 0 : i32
    %c0_i32_1 = arith.constant 0 : i32
    return %arg0, %c0_i32, %c0_i32_0 : i32, i32, i32
  }
  func.func @transform_1(%arg0: i32) -> (i32, i32, i32) {
    %c0_i32 = arith.constant 0 : i32
    %c0_i32_0 = arith.constant 0 : i32
    %c0_i32_1 = arith.constant 0 : i32
    return %arg0, %c0_i32, %c0_i32_0 : i32, i32, i32
  }
  func.func @transform_2(%arg0: i32) -> (i32, i32, i32) {
    %c0_i32 = arith.constant 0 : i32
    %c0_i32_0 = arith.constant 0 : i32
    %c0_i32_1 = arith.constant 0 : i32
    return %arg0, %c0_i32, %c0_i32_0 : i32, i32, i32
  }
  func.func @transform_3(%arg0: i32) -> (i32, i32, i32) {
    %c0_i32 = arith.constant 0 : i32
    %c0_i32_0 = arith.constant 0 : i32
    %c0_i32_1 = arith.constant 0 : i32
    return %arg0, %c0_i32, %c0_i32_0 : i32, i32, i32
  }
  func.func @transform_4(%arg0: i32) -> (i32, i32) {
    %c0_i32 = arith.constant 0 : i32
    %c0_i32_0 = arith.constant 0 : i32
    %c0_i32_1 = arith.constant 0 : i32
    return %c0_i32, %c0_i32_0 : i32, i32
  }
  func.func @transform_5(%arg0: i32) -> (i32, i32, i32) {
    %c0_i32 = arith.constant 0 : i32
    %c0_i32_0 = arith.constant 0 : i32
    %c0_i32_1 = arith.constant 0 : i32
    return %arg0, %c0_i32, %c0_i32_0 : i32, i32, i32
  }
}

</mosaic_0001>

<llo_original>
// kernel: tpu_custom_call.1
$region0: #{tpu_custom_call.1}
  #allocation0 [shape = 'u32[]', space=smem, size = 0x4, offset = 0x4, fixed_abs, tag = 'smem constant byte address 0x4 - core index']
  #allocation1 [shape = 'u32[144,128]{1,0:T(1,128)}', space=vmem, size = 0x12000, scoped, tag = 'internal scratch']
  %s0 = inlined_call_operand.hbm [shape: f32[2,16,32], index: 0, kind: input, shape index: {}]
  %s1 = inlined_call_operand.vmem [shape: s32[2,1,8], index: 1, kind: input, shape index: {}]
  %s2 = inlined_call_operand.vmem [shape: s32[2,1,8], index: 2, kind: input, shape index: {}]
  %s3 = inlined_call_operand.vmem [shape: f32[2,1,8], index: 3, kind: input, shape index: {}]
  %s4 = inlined_call_operand.hbm [shape: f32[10,32], index: 4, kind: input, shape index: {}]
  %s5 = inlined_call_operand.hbm [shape: f32[2,8,128], index: 5, kind: output, shape index: {}]
  %s6 = sld [smem:[#allocation0]]
  $region61: #{tpu_custom_call.1} parent=0
    _
  %s8 = ssub.s32 1, %s6
  %s9 = scalar_select 0, %s8, %s6
  $region1: #{tpu_custom_call.1} parent=0
    #allocation2 [shape = 'u8[16384]{0}', space=vmem, size = 0x4000, scoped, tag = 'input window, operand 0']
    #allocation3 [shape = 's32[2]{0}', space=sflag, size = 0x8, scoped, tag = 'scoped memory for tpu_custom_call.1']
    #allocation4 [shape = 's32[2]{0}', space=sflag, size = 0x8, scoped, tag = 'scoped memory for tpu_custom_call.1']
    #allocation5 [shape = 'u8[8192]{0}', space=vmem, size = 0x2000, scoped, tag = 'input window, operand 4, single buffered']
    #allocation6 [shape = 's32[1]{0}', space=sflag, size = 0x4, scoped, tag = 'scoped memory for tpu_custom_call.1']
    #allocation7 [shape = 'u8[8192]{0}', space=vmem, size = 0x2000, scoped, tag = 'output window, operand 0']
    %10 = vsyncpa [#allocation3], 0
    %s11 = scalar_lea.sflag [#allocation3], 1
    %12 = vsyncpa %s11, 0
    %13 = vsyncpa [#allocation6], 0
    %14 = vsyncpa [#allocation4], 0
    %s15 = scalar_lea.sflag [#allocation4], 1
    %16 = vsyncpa %s15, 0
    loop: start=0, step=1, limit=4
    $region2: #{tpu_custom_call.1} parent=1 // loop_pre_header
      _
    $region3: #{tpu_custom_call.1} parent=1 // loop_header
      %s18 = sphi 0, %s22
      %p19 = scmp.ge.s32.totalorder %s18, 4
      %s28 = sphi 0, %s30
      %s31 = sphi 0, %s28
      %s32 = sphi 0, %s31
      %s48 = sphi 0, %s32
      %s54 = sphi 0, %s56
      %s57 = sphi 0, %s54
      %s58 = sphi 0, %s57
      %s74 = sphi 0, %s58
      %s80 = sphi 0, %s82
      %s83 = sphi 0, %s80
      %s84 = sphi 0, %s83
      %s100 = sphi 0, %s84
      %s106 = sphi 0, %s108
      %s109 = sphi 0, %s106
      %s110 = sphi 0, %s109
      %s126 = sphi 0, %s110
      %s130 = sphi 0, %s130
      %s132 = sphi 0, %s130
      %s133 = sphi 0, %s132
      %s147 = sphi 0, %s133
      %s153 = sphi 0, %s155
      %s156 = sphi 0, %s153
      %s157 = sphi 0, %s156
      %s173 = sphi 0, %s157
    $region4: #{tpu_custom_call.1} parent=1 // loop_header_branch
      %21 = sbr.rel (%p19) target = $region8
    $region5: #{tpu_custom_call.1} parent=1 // loop_body
      %s23 = ssub.s32 %s18, 1
      %s24 = ssub.s32 %s18, 2
      %s25 = sadd.s32 %s18, 1
      %s26 = ssub.s32 %s18, %s25
      %p27 = scmp.eq.s32.totalorder %s26, 0
      %s29 = sadd.s32 %s28, 1
      %s30 = scalar_select %p27, %s28, %s29
      %p33 = pneg %p27
      %p34 = scmp.eq.s32.totalorder %s18, 1
      %p35 = por %p33, %p34
      %p36 = scmp.ne.s32.totalorder %s28, %s31
      %p37 = scmp.eq.s32.totalorder %s18, 0
      %p38 = por %p36, %p37
      %p39 = scmp.ne.s32.totalorder %s28, %s31
      %p40 = scmp.eq.s32.totalorder %s23, 1
      %p41 = por %p39, %p40
      %p42 = scmp.ne.s32.totalorder %s31, %s32
      %p43 = scmp.eq.s32.totalorder %s23, 0
      %p44 = por %p42, %p43
      %p45 = scmp.ne.s32.totalorder %s31, %s32
      %p46 = scmp.eq.s32.totalorder %s24, 1
      %p47 = por %p45, %p46
      %p49 = scmp.ne.s32.totalorder %s32, %s48
      %p50 = scmp.eq.s32.totalorder %s24, 0
      %p51 = por %p49, %p50
      %s52 = ssub.s32 %s18, %s25
      %p53 = scmp.eq.s32.totalorder %s52, 0
      %s55 = sadd.s32 %s54, 1
      %s56 = scalar_select %p53, %s54, %s55
      %p59 = pneg %p53
      %p60 = scmp.eq.s32.totalorder %s18, 1
      %p61 = por %p59, %p60
      %p62 = scmp.ne.s32.totalorder %s54, %s57
      %p63 = scmp.eq.s32.totalorder %s18, 0
      %p64 = por %p62, %p63
      %p65 = scmp.ne.s32.totalorder %s54, %s57
      %p66 = scmp.eq.s32.totalorder %s23, 1
      %p67 = por %p65, %p66
      %p68 = scmp.ne.s32.totalorder %s57, %s58
      %p69 = scmp.eq.s32.totalorder %s23, 0
      %p70 = por %p68, %p69
      %p71 = scmp.ne.s32.totalorder %s57, %s58
      %p72 = scmp.eq.s32.totalorder %s24, 1
      %p73 = por %p71, %p72
      %p75 = scmp.ne.s32.totalorder %s58, %s74
      %p76 = scmp.eq.s32.totalorder %s24, 0
      %p77 = por %p75, %p76
      %s78 = ssub.s32 %s18, %s25
      %p79 = scmp.eq.s32.totalorder %s78, 0
      %s81 = sadd.s32 %s80, 1
      %s82 = scalar_select %p79, %s80, %s81
      %p85 = pneg %p79
      %p86 = scmp.eq.s32.totalorder %s18, 1
      %p87 = por %p85, %p86
      %p88 = scmp.ne.s32.totalorder %s80, %s83
      %p89 = scmp.eq.s32.totalorder %s18, 0
      %p90 = por %p88, %p89
      %p91 = scmp.ne.s32.totalorder %s80, %s83
      %p92 = scmp.eq.s32.totalorder %s23, 1
      %p93 = por %p91, %p92
      %p94 = scmp.ne.s32.totalorder %s83, %s84
      %p95 = scmp.eq.s32.totalorder %s23, 0
      %p96 = por %p94, %p95
      %p97 = scmp.ne.s32.totalorder %s83, %s84
      %p98 = scmp.eq.s32.totalorder %s24, 1
      %p99 = por %p97, %p98
      %p101 = scmp.ne.s32.totalorder %s84, %s100
      %p102 = scmp.eq.s32.totalorder %s24, 0
      %p103 = por %p101, %p102
      %s104 = ssub.s32 %s18, %s25
      %p105 = scmp.eq.s32.totalorder %s104, 0
      %s107 = sadd.s32 %s106, 1
      %s108 = scalar_select %p105, %s106, %s107
      %p111 = pneg %p105
      %p112 = scmp.eq.s32.totalorder %s18, 1
      %p113 = por %p111, %p112
      %p114 = scmp.ne.s32.totalorder %s106, %s109
      %p115 = scmp.eq.s32.totalorder %s18, 0
      %p116 = por %p114, %p115
      %p117 = scmp.ne.s32.totalorder %s106, %s109
      %p118 = scmp.eq.s32.totalorder %s23, 1
      %p119 = por %p117, %p118
      %p120 = scmp.ne.s32.totalorder %s109, %s110
      %p121 = scmp.eq.s32.totalorder %s23, 0
      %p122 = por %p120, %p121
      %p123 = scmp.ne.s32.totalorder %s109, %s110
      %p124 = scmp.eq.s32.totalorder %s24, 1
      %p125 = por %p123, %p124
      %p127 = scmp.ne.s32.totalorder %s110, %s126
      %p128 = scmp.eq.s32.totalorder %s24, 0
      %p129 = por %p127, %p128
      %s131 = sadd.s32 %s130, 1
      %p134 = scmp.eq.s32.totalorder %s18, 1
      %p135 = scmp.ne.s32.totalorder %s130, %s132
      %p136 = scmp.eq.s32.totalorder %s18, 0
      %p137 = por %p135, %p136
      %p138 = scmp.ne.s32.totalorder %s130, %s132
      %p139 = scmp.eq.s32.totalorder %s23, 1
      %p140 = por %p138, %p139
      %p141 = scmp.ne.s32.totalorder %s132, %s133
      %p142 = scmp.eq.s32.totalorder %s23, 0
      %p143 = por %p141, %p142
      %p144 = scmp.ne.s32.totalorder %s132, %s133
      %p145 = scmp.eq.s32.totalorder %s24, 1
      %p146 = por %p144, %p145
      %p148 = scmp.ne.s32.totalorder %s133, %s147
      %p149 = scmp.eq.s32.totalorder %s24, 0
      %p150 = por %p148, %p149
      %s151 = ssub.s32 %s18, %s25
      %p152 = scmp.eq.s32.totalorder %s151, 0
      %s154 = sadd.s32 %s153, 1
      %s155 = scalar_select %p152, %s153, %s154
      %p158 = pneg %p152
      %p159 = scmp.eq.s32.totalorder %s18, 1
      %p160 = por %p158, %p159
      %p161 = scmp.ne.s32.totalorder %s153, %s156
      %p162 = scmp.eq.s32.totalorder %s18, 0
      %p163 = por %p161, %p162
      %p164 = scmp.ne.s32.totalorder %s153, %s156
      %p165 = scmp.eq.s32.totalorder %s23, 1
      %p166 = por %p164, %p165
      %p167 = scmp.ne.s32.totalorder %s156, %s157
      %p168 = scmp.eq.s32.totalorder %s23, 0
      %p169 = por %p167, %p168
      %p170 = scmp.ne.s32.totalorder %s156, %s157
      %p171 = scmp.eq.s32.totalorder %s24, 1
      %p172 = por %p170, %p171
      %p174 = scmp.ne.s32.totalorder %s157, %s173
      %p175 = scmp.eq.s32.totalorder %s24, 0
      %p176 = por %p174, %p175
      %p177 = scmp.le.s32.totalorder 1, %s18
      %p178 = scmp.lt.s32.totalorder %s18, 3
      %p179 = pnand %p177, %p178
      %p180 = pneg %p179
      // Predicated region
      $region9: #{tpu_custom_call.1} parent=5 // pred_check
        _
      $region10: #{tpu_custom_call.1} parent=5 // pred_check_branch
        %182 = sbr.rel (%p179) target = $region12
      $region11: #{tpu_custom_call.1} parent=5 // pred_region
        %s183 = ssub.s32 %s18, 1
        // Predicated region
        $region13: #{tpu_custom_call.1} parent=11 // pred_check
          %p184 = pneg %p143
        $region14: #{tpu_custom_call.1} parent=11 // pred_check_branch
          %186 = sbr.rel (%p184) target = $region16
        $region15: #{tpu_custom_call.1} parent=11 // pred_region
          %s188 = ssub.s32 256, 256
          %189 = vsyncadd [#allocation6], %s188
          %s190 = sshll.u32 [#allocation5], 4
          %s191 = int_to_ptr.vmem [resolvable:$true] %s190
          %196 = dma.hbm_to_vmem [thread:$0]  %s4, 256, %s191, [#allocation6], 128, 128, 8
        $region16: #{tpu_custom_call.1} parent=11 // pred_fallthru
          _
      $region12: #{tpu_custom_call.1} parent=5 // pred_fallthru
        _
      %p197 = scmp.lt.s32.totalorder %s18, 2
      // Predicated region
      $region17: #{tpu_custom_call.1} parent=5 // pred_check
        %p198 = pneg %p197
      $region18: #{tpu_custom_call.1} parent=5 // pred_check_branch
        %200 = sbr.rel (%p198) target = $region20
      $region19: #{tpu_custom_call.1} parent=5 // pred_region
        // Predicated region
        $region21: #{tpu_custom_call.1} parent=19 // pred_check
          %p201 = pneg %p38
        $region22: #{tpu_custom_call.1} parent=19 // pred_check_branch
          %203 = sbr.rel (%p201) target = $region24
        $region23: #{tpu_custom_call.1} parent=19 // pred_region
          %s204 = sand.u32 %s28, 1
          %s205 = scalar_lea.sflag [#allocation3], %s204
          %s206 = sand.u32 %s28, 1
          %s207 = smul.addr %s206, 16
          %s208 = scalar_lea.vmem [#allocation2], %s207
          %s210 = ssub.s32 256, 256
          %211 = vsyncadd %s205, %s210
          %s212 = smul.addr %s18, 2
          %s213 = smul.addr %s212, 128
          %s214 = scalar_lea.hbm %s0, %s213
          %s215 = sshll.u32 %s208, 4
          %s216 = int_to_ptr.vmem [resolvable:$true] %s215
          %221 = dma.hbm_to_vmem [thread:$0]  %s214, 256, %s216, %s205, 128, 128, 8
        $region24: #{tpu_custom_call.1} parent=19 // pred_fallthru
          _
        // Predicated region
        $region25: #{tpu_custom_call.1} parent=19 // pred_check
          %p222 = pneg %p64
        $region26: #{tpu_custom_call.1} parent=19 // pred_check_branch
          %224 = sbr.rel (%p222) target = $region28
        $region27: #{tpu_custom_call.1} parent=19 // pred_region
          %p225 = scmp.lt.s32.totalorder %s18, 1
          %s226 = scalar_select %p225, %s18, 1
          %s227 = scalar_lea.vmem %s1, %s226
        $region28: #{tpu_custom_call.1} parent=19 // pred_fallthru
          _
        // Predicated region
        $region29: #{tpu_custom_call.1} parent=19 // pred_check
          %p228 = pneg %p90
        $region30: #{tpu_custom_call.1} parent=19 // pred_check_branch
          %230 = sbr.rel (%p228) target = $region32
        $region31: #{tpu_custom_call.1} parent=19 // pred_region
          %p231 = scmp.lt.s32.totalorder %s18, 1
          %s232 = scalar_select %p231, %s18, 1
          %s233 = scalar_lea.vmem %s2, %s232
        $region32: #{tpu_custom_call.1} parent=19 // pred_fallthru
          _
        // Predicated region
        $region33: #{tpu_custom_call.1} parent=19 // pred_check
          %p234 = pneg %p116
        $region34: #{tpu_custom_call.1} parent=19 // pred_check_branch
          %236 = sbr.rel (%p234) target = $region36
        $region35: #{tpu_custom_call.1} parent=19 // pred_region
          %p237 = scmp.lt.s32.totalorder %s18, 1
          %s238 = scalar_select %p237, %s18, 1
          %s239 = scalar_lea.vmem %s3, %s238
        $region36: #{tpu_custom_call.1} parent=19 // pred_fallthru
          _
      $region20: #{tpu_custom_call.1} parent=5 // pred_fallthru
        _
      %p240 = scmp.le.s32.totalorder 1, %s18
      %p241 = scmp.lt.s32.totalorder %s18, 3
      %p242 = pnand %p240, %p241
      %p243 = pneg %p242
      // Predicated region
      $region37: #{tpu_custom_call.1} parent=5 // pred_check
        _
      $region38: #{tpu_custom_call.1} parent=5 // pred_check_branch
        %245 = sbr.rel (%p242) target = $region40
      $region39: #{tpu_custom_call.1} parent=5 // pred_region
        %s246 = ssub.s32 %s18, 1
        %s247 = sand.u32 %s31, 1
        %s248 = scalar_lea.sflag [#allocation3], %s247
        %s249 = sand.u32 %s31, 1
        %s250 = smul.addr %s249, 16
        %s251 = scalar_lea.vmem [#allocation2], %s250
        // Predicated region
        $region41: #{tpu_custom_call.1} parent=39 // pred_check
          %p252 = pneg %p44
        $region42: #{tpu_custom_call.1} parent=39 // pred_check_branch
          %254 = sbr.rel (%p252) target = $region44
        $region43: #{tpu_custom_call.1} parent=39 // pred_region
          %255 = dma.done %s248, 256
        $region44: #{tpu_custom_call.1} parent=39 // pred_fallthru
          _
        // Predicated region
        $region45: #{tpu_custom_call.1} parent=39 // pred_check
          %p256 = pneg %p143
        $region46: #{tpu_custom_call.1} parent=39 // pred_check_branch
          %258 = sbr.rel (%p256) target = $region48
        $region47: #{tpu_custom_call.1} parent=39 // pred_region
          %259 = dma.done [#allocation6], 256
        $region48: #{tpu_custom_call.1} parent=39 // pred_fallthru
          _
        %s260 = sand.u32 %s31, 1
        %s261 = scalar_lea.sflag [#allocation3], %s260
        %s262 = sand.u32 %s31, 1
        %s263 = smul.addr %s262, 16
        %s264 = scalar_lea.vmem [#allocation2], %s263
        %p265 = pneg %p44
        %p266 = pneg %p41
        %p267 = scmp.lt.s32.totalorder %s23, 1
        %s268 = scalar_select %p267, %s23, 1
        %s269 = scalar_lea.vmem %s1, %s268
        %p270 = pneg %p70
        %p271 = pneg %p67
        %p272 = scmp.lt.s32.totalorder %s23, 1
        %s273 = scalar_select %p272, %s23, 1
        %s274 = scalar_lea.vmem %s2, %s273
        %p275 = pneg %p96
        %p276 = pneg %p93
        %p277 = scmp.lt.s32.totalorder %s23, 1
        %s278 = scalar_select %p277, %s23, 1
        %s279 = scalar_lea.vmem %s3, %s278
        %p280 = pneg %p122
        %p281 = pneg %p119
        %p282 = pneg %p143
        %p283 = pneg %p140
        %p284 = pneg %p169
        %p285 = pneg %p166
        %s286 = sand.u32 %s156, 1
        %s287 = scalar_lea.sflag [#allocation4], %s286
        %s288 = sand.u32 %s156, 1
        %s289 = smul.addr %s288, 8
        %s290 = scalar_lea.vmem [#allocation7], %s289
        %p291 = scmp.lt.s32.totalorder %s23, 1
        %s292 = scalar_select %p291, %s23, 1
        %s293 = scalar_lea.vmem %s1, %s292
        %p294 = scmp.lt.s32.totalorder %s23, 1
        %s295 = scalar_select %p294, %s23, 1
        %s296 = scalar_lea.vmem %s2, %s295
        %p297 = scmp.lt.s32.totalorder %s23, 1
        %s298 = scalar_select %p297, %s23, 1
        %s299 = scalar_lea.vmem %s3, %s298
        %v300 = vld [vmem:[%s251] sm:$0xff]
        %v301 = vld [vmem:[%s251 + $0x8] sm:$0xff]
        %v302 = vld [vmem:[#allocation5] sm:$0xff]
        %v303 = vld [vmem:[#allocation5 + $0x8] sm:$0x3]
        %v304 = vld [vmem:[%s293] sm:$0x1]
        %v305 = vld [vmem:[%s296] sm:$0x1]
        %v306 = vld [vmem:[%s299] sm:$0x1]
        %v307 = vsub.s32 %v305, %v304
        %v308 = vcvt.s32.f32 %v307
        %v309 = vmax.f32 %v308, 1.0
        %v310 = vlog2.pop %v309
        %v311 = vmul.f32 %v310, 0.6931472
        %v312 = vrcp.pop 0.6931472
        %v313 = vmul.f32 %v311, %v312
        %v314 = vfloor.f32 %v313
        %v315 = vcvt.f32.s32.to.zero.pseudo %v314
        %v316 = vadd.s32 %v315, 3
        %vm317 = vcmp.le.s32.totalorder %v307, 4
        %v318 = vsel %vm317, %v307, %v316
        %vm319 = vcmp.gt.s32.totalorder %v318, 0
        %v320 = vsel %vm319, %v318, 0
        %vm321 = vcmp.lt.s32.totalorder %v320, 9
        %v322 = vsel %vm321, %v320, 9
        %v323 = vadd.s32 %v322, 16
        %v324 = vlaneseq
        %v325 = vshrl.u32 %v324, 7
        %v326 = vsub.s32 0, %v325
        %v327 = vrot.slane %v305, %v326
        %328 = vrot.lane.b32.xlu0 %v327, 8
        %v329 = vpop.permute.xlu0 %328
        %v330 = vlaneseq
        %v331 = vshrl.u32 %v330, 7
        %v332 = vsub.s32 0, %v331
        %v333 = vrot.slane %v323, %v332
        %334 = vrot.lane.b32.xlu0 %v333, 16
        %v335 = vpop.permute.xlu0 %334
        %vm336 = vcmask 64512
        %v337 = vsel %vm336, %v304, %v329
        %vm338 = vcmask 130048
        %v339 = vsel %vm338, %v337, %v335
        %v341 = vlaneseq
        %v342 = vshrl.u32 %v341, 7
        %v343 = vsub.s32 0, %v342
        %v344 = vrot.slane %v306, %v343
        %345 = vrot.lane.b32.xlu0 %v344, 8
        %v346 = vpop.permute.xlu0 %345
        %348 = vrot.lane.b32.xlu0 %v344, 16
        %v349 = vpop.permute.xlu0 %348
        %v351 = vsel %vm336, %v306, %v346
        %v352 = vsel %vm338, %v351, %v349
        %v353 = vlaneseq
        %v354 = vshrl.u32 %v353, 7
        %v355 = vadd.s32 %v354, 8
        %v356 = vadd.s32 %v354, 16
        %v357 = vadd.s32 %v354, 24
        %v358 = vlaneseq
        %v359 = vshrl.u32 %v358, 7
        %v360 = vsub.s32 0, %v359
        %v361 = vrot.slane %v339, %v360
        %vm362 = vcmp.eq.s32.totalorder %v354, %v361
        %vm363 = vcmp.eq.s32.totalorder %v355, %v361
        %vm364 = vcmp.eq.s32.totalorder %v356, %v361
        %vm365 = vcmp.eq.s32.totalorder %v357, %v361
        %v366 = vlaneseq
        %v367 = vshrl.u32 %v366, 7
        %v368 = vsub.s32 0, %v367
        %v369 = vrot.slane %v352, %v368
        %v370 = vsel %vm362, %v369, 0.0
        %v371 = vsel %vm363, %v369, 0.0
        %v372 = vsel %vm364, %v369, 0.0
        %v373 = vsel %vm365, %v369, 0.0
        %374 = vxpose.xlu0.b32.start [1/16] %v370, 128
        %375 = vxpose.xlu0.b32.cont [2/16] %v371, 128
        %376 = vxpose.xlu0.b32.cont [3/16] %v372, 128
        %377 = vxpose.xlu0.b32.cont [4/16] %v373, 128
        %378 = vxpose.xlu0.b32.cont [5/16] 0.0, 128
        %379 = vxpose.xlu0.b32.cont [6/16] 0.0, 128
        %380 = vxpose.xlu0.b32.cont [7/16] 0.0, 128
        %381 = vxpose.xlu0.b32.cont [8/16] 0.0, 128
        %382 = vxpose.xlu0.b32.cont [9/16] 0.0, 128
        %383 = vxpose.xlu0.b32.cont [10/16] 0.0, 128
        %384 = vxpose.xlu0.b32.cont [11/16] 0.0, 128
        %385 = vxpose.xlu0.b32.cont [12/16] 0.0, 128
        %386 = vxpose.xlu0.b32.cont [13/16] 0.0, 128
        %387 = vxpose.xlu0.b32.cont [14/16] 0.0, 128
        %388 = vxpose.xlu0.b32.cont [15/16] 0.0, 128
        %389 = vxpose.xlu0.b32.end [16/16] 0.0, 128
        %v390 = vpop.trf.xlu0
        %v391 = vpop.trf.xlu0
        %v392 = vpop.trf.xlu0
        %v393 = vpop.trf.xlu0
        %v394 = vpop.trf.xlu0
        %v395 = vpop.trf.xlu0
        %v396 = vpop.trf.xlu0
        %v397 = vpop.trf.xlu0
        %v398 = vpop.trf.xlu0
        %v399 = vpop.trf.xlu0
        %v400 = vpop.trf.xlu0
        %v401 = vpop.trf.xlu0
        %v402 = vpop.trf.xlu0
        %v403 = vpop.trf.xlu0
        %v404 = vpop.trf.xlu0
        %v405 = vpop.trf.xlu0
        %vm406 = vcmask 211968
        %v408 = vsel %vm406, %v390, 0
        %v411 = vsel %vm406, %v391, 0
        %v414 = vsel %vm406, %v392, 0
        %vm416 = vcmask 1041408
        %v418 = vsel %vm416, %v303, 0
        %420 = vmatprep.subr.mxu0 0.0
        %421 = vmatpush1.msra.mxu0 %v300
        %422 = vmatprep.subr.mxu0 0.0
        %423 = vmatpush1.msra.mxu0 %v301
        %424 = vmatprep.subr.mxu0 0.0
        %425 = vmatpush1.msra.mxu0 %v302
        %426 = vmatprep.subr.mxu0 0.0
        %427 = vmatpush1.msra.mxu0 %v418
        %428 = vmatprep.subr.mxu0 0.0
        %429 = vmatpush1.msra.mxu0 0.0
        %430 = vmatprep.subr.mxu0 0.0
        %431 = vmatpush1.msra.mxu0 0.0
        %432 = vmatprep.subr.mxu0 0.0
        %433 = vmatpush1.msra.mxu0 0.0
        %434 = vmatprep.subr.mxu0 0.0
        %435 = vmatpush1.msra.mxu0 0.0
        %436 = vmatprep.subr.mxu0 0.0
        %437 = vmatpush1.msra.mxu0 0.0
        %438 = vmatprep.subr.mxu0 0.0
        %439 = vmatpush1.msra.mxu0 0.0
        %440 = vmatprep.subr.mxu0 0.0
        %441 = vmatpush1.msra.mxu0 0.0
        %442 = vmatprep.subr.mxu0 0.0
        %443 = vmatpush1.msra.mxu0 0.0
        %444 = vmatprep.subr.mxu0 0.0
        %445 = vmatpush1.msra.mxu0 0.0
        %446 = vmatprep.subr.mxu0 0.0
        %447 = vmatpush1.msra.mxu0 0.0
        %448 = vmatprep.subr.mxu0 0.0
        %449 = vmatpush1.msra.mxu0 0.0
        %450 = vmatprep.subr.mxu0 0.0
        %451 = vmatpush1.msra.mxu0 0.0
        %452 = vmatprep.subr.mxu0 0.0
        %453 = vmatpush1.msra.mxu0 0.0
        %454 = vmatprep.subr.mxu0 0.0
        %455 = vmatpush1.msra.mxu0 0.0
        %456 = vmatprep.subr.mxu0 0.0
        %457 = vmatpush1.msra.mxu0 0.0
        %458 = vmatprep.subr.mxu0 0.0
        %459 = vmatpush1.msra.mxu0 0.0
        %460 = vmatprep.subr.mxu0 0.0
        %461 = vmatpush1.msra.mxu0 0.0
        %462 = vmatprep.subr.mxu0 0.0
        %463 = vmatpush1.msra.mxu0 0.0
        %464 = vmatprep.subr.mxu0 0.0
        %465 = vmatpush1.msra.mxu0 0.0
        %466 = vmatprep.subr.mxu0 0.0
        %467 = vmatpush1.msra.mxu0 0.0
        %468 = vmatprep.subr.mxu0 0.0
        %469 = vmatpush1.msra.mxu0 0.0
        %470 = vmatprep.subr.mxu0 0.0
        %471 = vmatpush1.msra.mxu0 0.0
        %472 = vmatprep.subr.mxu0 0.0
        %473 = vmatpush1.msra.mxu0 0.0
        %474 = vmatprep.subr.mxu0 0.0
        %475 = vmatpush1.msra.mxu0 0.0
        %476 = vmatprep.subr.mxu0 0.0
        %477 = vmatpush1.msra.mxu0 0.0
        %478 = vmatprep.subr.mxu0 0.0
        %479 = vmatpush1.msra.mxu0 0.0
        %480 = vmatprep.subr.mxu0 0.0
        %481 = vmatpush1.msra.mxu0 0.0
        %482 = vmatprep.subr.mxu0 0.0
        %483 = vmatpush1.msra.mxu0 0.0
        %484 = vmatprep.mubr.f32.mxu0 0.0
        %485 = vmatmul.mubr.f32.gmra.mrb[0].mxu0 %v408
        %v486 = vpop.f32.mrb[0].mxu0
        %v487 = vadd.f32 0.0, %v486
        %v488 = vpop.f32.mrb[0].mxu0
        %489 = vmatprep.mubr.f32.mxu0 0.0
        %490 = vmatmul.mubr.f32.gmra.mrb[0].mxu0 %v411
        %v491 = vpop.f32.mrb[0].mxu0
        %v492 = vadd.f32 0.0, %v491
        %v493 = vpop.f32.mrb[0].mxu0
        %494 = vmatprep.mubr.f32.mxu0 0.0
        %495 = vmatmul.mubr.f32.gmra.mrb[0].mxu0 %v414
        %v496 = vpop.f32.mrb[0].mxu0
        %v497 = vadd.f32 0.0, %v496
        %v498 = vpop.f32.mrb[0].mxu0
        %499 = vdwg.mxu0
        %vm500 = vcmask 261120
        %501 = vst.msk [vmem:[%s290] sm:$0xff] %vm500, %v487
        %503 = vrot.lane.b32.xlu0 %v492, 32
        %v504 = vpop.permute.xlu0 %503
        %vm506 = vcmask 523520
        %507 = vst.msk [vmem:[%s290] sm:$0xff] %vm506, %v504
        %509 = vrot.lane.b32.xlu0 %v497, 64
        %v510 = vpop.permute.xlu0 %509
        %vm512 = vcmask 785920
        %513 = vst.msk [vmem:[%s290] sm:$0xff] %vm512, %v510
        %vm514 = vcmask 1048320
        %515 = vst.msk [vmem:[%s290] sm:$0xff] %vm514, 0.0
        %s516 = sand.u32 %s156, 1
        %s517 = scalar_lea.sflag [#allocation4], %s516
        %s518 = sand.u32 %s156, 1
        %s519 = smul.addr %s518, 8
        %s520 = scalar_lea.vmem [#allocation7], %s519
        // Predicated region
        $region49: #{tpu_custom_call.1} parent=39 // pred_check
          %p521 = pneg %p166
        $region50: #{tpu_custom_call.1} parent=39 // pred_check_branch
          %523 = sbr.rel (%p521) target = $region52
        $region51: #{tpu_custom_call.1} parent=39 // pred_region
          %s525 = ssub.s32 128, 128
          %526 = vsyncadd %s517, %s525
          %s527 = smul.addr %s23, 128
          %s528 = scalar_lea.hbm %s5, %s527
          %s530 = sshll.u32 %s520, 4
          %s531 = int_to_ptr.vmem [resolvable:$true] %s530
          %533 = dma.vmem_to_hbm [thread:$0]  %s531, 128, %s528, %s517
        $region52: #{tpu_custom_call.1} parent=39 // pred_fallthru
          _
      $region40: #{tpu_custom_call.1} parent=5 // pred_fallthru
        _
      %p534 = scmp.le.s32.totalorder 2, %s18
      // Predicated region
      $region53: #{tpu_custom_call.1} parent=5 // pred_check
        %p535 = pneg %p534
      $region54: #{tpu_custom_call.1} parent=5 // pred_check_branch
        %537 = sbr.rel (%p535) target = $region56
      $region55: #{tpu_custom_call.1} parent=5 // pred_region
        %s538 = ssub.s32 %s18, 2
        // Predicated region
        $region57: #{tpu_custom_call.1} parent=55 // pred_check
          %p539 = pneg %p172
        $region58: #{tpu_custom_call.1} parent=55 // pred_check_branch
          %541 = sbr.rel (%p539) target = $region60
        $region59: #{tpu_custom_call.1} parent=55 // pred_region
          %s542 = sand.u32 %s157, 1
          %s543 = scalar_lea.sflag [#allocation4], %s542
          %s544 = sand.u32 %s157, 1
          %s545 = smul.addr %s544, 8
          %s546 = scalar_lea.vmem [#allocation7], %s545
          %547 = dma.done %s543, 128
        $region60: #{tpu_custom_call.1} parent=55 // pred_fallthru
          _
      $region56: #{tpu_custom_call.1} parent=5 // pred_fallthru
        _
    $region6: #{tpu_custom_call.1} parent=1 // loop_footer
      %s22 = sadd.s32 1, %s18
    $region7: #{tpu_custom_call.1} parent=1 // loop_footer_branch
      %17 = sbr.rel target = $region3
    $region8: #{tpu_custom_call.1} parent=1 // loop_exit
      _
    %548 = vsyncpa [#allocation3], 1
    %s549 = scalar_lea.sflag [#allocation3], 1
    %550 = vsyncpa %s549, 1
    %551 = vsyncpa [#allocation6], 1
    %552 = vsyncpa [#allocation4], 1
    %s553 = scalar_lea.sflag [#allocation4], 1
    %554 = vsyncpa %s553, 1

</llo_original>
